<compile_context>
chip_gen: v7x
topology: tpu7x:2x2x1
jax: 0.10.0
libtpu: 0.0.40
codegen_flags: <defaults>
</compile_context>

<pallas_src>
import math
import functools

import jax
import jax.numpy as jnp
import numpy as np
from jax.experimental import pallas as pl
from jax.experimental.pallas import tpu as pltpu


def _make_loss_kernel(NN):
    """Per-tile kernel: writes per-row margin sums and per-row square sums."""

    def kernel(hp_ref, tp_ref, re_ref, hn_ref, tn_ref,
               marg_out_ref, sq_out_ref):
        hp = hp_ref[...]                       # (TB, D)  positive heads
        tp = tp_ref[...]                       # (TB, D)  positive tails
        re = re_ref[...]                       # (TB, D)  relation embeddings

        # Positive TransE score per row: -||h + r - t||_1  -> (TB, 1)
        pos = -jnp.sum(jnp.abs(hp + re - tp), axis=-1, keepdims=True)

        # Negatives arrive as (NN, TB, D); a short static loop over NN keeps
        # every vector op on dense (TB, 128) tiles and avoids any sublane
        # broadcast of `re`.
        marg_sum = jnp.zeros_like(pos)
        for j in range(NN):
            neg_j = -jnp.sum(jnp.abs(hn_ref[j] + re - tn_ref[j]),
                             axis=-1, keepdims=True)         # (TB, 1)
            marg_sum = marg_sum + jnp.maximum(1.0 - pos + neg_j, 0.0)

        marg_out_ref[...] = marg_sum                          # (TB, 1)

        # Per-row sum of squares for the L2 regularizer (summed over h, t, r).
        sq = hp * hp + tp * tp + re * re                      # (TB, D)
        sq_out_ref[...] = jnp.sum(sq, axis=-1, keepdims=True)  # (TB, 1)

    return kernel


def _pick_tile_b(B, want):
    """Batch tile: a multiple of 8, never larger than `want` (VMEM budget),
    and small enough that the grid has >= 2 steps whenever B >= 16 (so v7x
    can shard the 'parallel' grid axis across both TensorCores).  Awkward
    batch sizes are handled by a partial last block (grid = cdiv(B, tb)),
    never by a full-batch block."""
    if B < 16:
        return B                        # one tiny full-array block
    want8 = max(8, (want // 8) * 8)
    half8 = max(8, (B // 2 // 8) * 8)   # largest multiple of 8 giving >=2 steps
    return min(want8, half8)


@functools.partial(jax.jit, static_argnames=("regularizer", "tile_b"))
def compute_loss_pallas(ent_embs, rels, neg_idx, rel_weight,
                        regularizer=0.01, tile_b=512):
    """Mirror of LinkPrediction.compute_loss for transe+margin.

    ent_embs   : (B, 2, dim) float32
    rels       : (B, 1) int32 relation indices
    neg_idx    : (B, NN, 2) int32 indices into ent_embs.reshape(2B, dim)
    rel_weight : (num_relations, dim) float32 embedding table
    """
    B, _, D = ent_embs.shape
    NN = neg_idx.shape[1]
    tb = _pick_tile_b(B, tile_b)
    n_blocks = pl.cdiv(B, tb)

    # --- plain-JAX glue: embedding lookups (gathers) ---
    rels_e = rel_weight[rels[:, 0]]                 # (B, D)
    heads_pos = ent_embs[:, 0, :]                   # (B, D)
    tails_pos = ent_embs[:, 1, :]                   # (B, D)
    flat = ent_embs.reshape(2 * B, D)
    neg_idx_t = jnp.transpose(neg_idx, (1, 0, 2))   # (NN, B, 2)
    heads_neg = flat[neg_idx_t[:, :, 0]]            # (NN, B, D)
    tails_neg = flat[neg_idx_t[:, :, 1]]            # (NN, B, D)

    kernel = _make_loss_kernel(NN)

    marg_rows, sq_rows = pl.pallas_call(
        kernel,
        out_shape=(jax.ShapeDtypeStruct((B, 1), jnp.float32),
                   jax.ShapeDtypeStruct((B, 1), jnp.float32)),
        grid_spec=pltpu.PrefetchScalarGridSpec(
            num_scalar_prefetch=0,
            grid=(n_blocks,),
            in_specs=[
                pl.BlockSpec((tb, D), lambda i: (i, 0)),
                pl.BlockSpec((tb, D), lambda i: (i, 0)),
                pl.BlockSpec((tb, D), lambda i: (i, 0)),
                pl.BlockSpec((NN, tb, D), lambda i: (0, i, 0)),
                pl.BlockSpec((NN, tb, D), lambda i: (0, i, 0)),
            ],
            out_specs=[
                pl.BlockSpec((tb, 1), lambda i: (i, 0)),
                pl.BlockSpec((tb, 1), lambda i: (i, 0)),
            ],
        ),
        compiler_params=pltpu.CompilerParams(
            dimension_semantics=("parallel",),
            vmem_limit_bytes=32 * 1024 * 1024),
    )(heads_pos, tails_pos, rels_e, heads_neg, tails_neg)

    # Outputs have exact (B, 1) shape, so partial-edge-block garbage never
    # lands here; the combine over B rows is tiny and runs in plain JAX.
    model_loss = jnp.sum(marg_rows) / (B * NN)
    if regularizer > 0:
        reg_loss = regularizer * jnp.sum(sq_rows) / (3.0 * B * D)
        return model_loss + reg_loss
    return model_loss


def compute_loss_ref(ent_embs, rels, neg_idx, rel_weight, regularizer):
    """Pure-JAX reference matching the PyTorch semantics exactly."""
    B, _, D = ent_embs.shape
    rels_e = rel_weight[rels[:, 0]][:, None, :]            # (B, 1, D)
    heads = ent_embs[:, 0:1, :]                            # (B, 1, D)
    tails = ent_embs[:, 1:2, :]                            # (B, 1, D)
    pos = -jnp.sum(jnp.abs(heads + rels_e - tails), axis=-1)   # (B, 1)
    flat = ent_embs.reshape(2 * B, D)
    neg_embs = flat[neg_idx]                               # (B, NN, 2, D)
    h_n = neg_embs[:, :, 0, :]
    t_n = neg_embs[:, :, 1, :]
    neg = -jnp.sum(jnp.abs(h_n + rels_e - t_n), axis=-1)   # (B, NN)
    marg = jnp.maximum(1.0 - pos + neg, 0.0)
    model_loss = jnp.mean(marg)
    reg = regularizer * (jnp.mean(heads ** 2) + jnp.mean(tails ** 2)
                         + jnp.mean(rels_e ** 2)) / 3.0
    return model_loss + reg


if __name__ == "__main__":
    B, NN, dim, num_relations = 16, 4, 128, 11
    regularizer = 0.01

    key = jax.random.PRNGKey(0)
    k1, k2, k3, k4 = jax.random.split(key, 4)

    # Deterministic xavier-uniform init of the relation embedding table
    # (nn.Embedding(num_relations, rel_dim) with rel_dim == dim for transe).
    fan_in, fan_out = dim, num_relations
    a = math.sqrt(6.0 / (fan_in + fan_out))
    rel_weight = jax.random.uniform(k1, (num_relations, dim), jnp.float32, -a, a)

    ent_embs = jax.random.normal(k2, (B, 2, dim), jnp.float32)
    rels = jax.random.randint(k3, (B, 1), 0, num_relations, jnp.int32)
    neg_idx = jax.random.randint(k4, (B, NN, 2), 0, 2 * B, jnp.int32)

    loss = compute_loss_pallas(ent_embs, rels, neg_idx, rel_weight,
                               regularizer=regularizer)
    loss = jax.block_until_ready(loss)

    ref = compute_loss_ref(ent_embs, rels, neg_idx, rel_weight, regularizer)
    np.testing.assert_allclose(float(loss), float(ref), rtol=1e-5, atol=1e-5)

    print("KERNEL_OK")
</pallas_src>

<mosaic_0001>
module attributes {stable_mosaic.version = 11 : i64} {
  func.func @kernel(%arg0: i32, %arg1: memref<8x128xf32, #tpu.memory_space<vmem>>, %arg2: memref<8x128xf32, #tpu.memory_space<vmem>>, %arg3: memref<8x128xf32, #tpu.memory_space<vmem>>, %arg4: memref<4x8x128xf32, #tpu.memory_space<vmem>>, %arg5: memref<4x8x128xf32, #tpu.memory_space<vmem>>, %arg6: memref<8x1xf32, #tpu.memory_space<vmem>>, %arg7: memref<8x1xf32, #tpu.memory_space<vmem>>) attributes {dimension_semantics = [#tpu.dimension_semantics<parallel>], iteration_bounds = array<i64: 2>, scalar_prefetch = 0 : i64, scratch_operands = 0 : i64, tpu.core_type = #tpu.core_type<tc>, window_params = [{transform_indices = @transform_0, window_bounds = array<i64: 8, 128>}, {transform_indices = @transform_1, window_bounds = array<i64: 8, 128>}, {transform_indices = @transform_2, window_bounds = array<i64: 8, 128>}, {transform_indices = @transform_3, window_bounds = array<i64: 4, 8, 128>}, {transform_indices = @transform_4, window_bounds = array<i64: 4, 8, 128>}, {transform_indices = @transform_5, window_bounds = array<i64: 8, 1>}, {transform_indices = @transform_6, window_bounds = array<i64: 8, 1>}]} {
    %c0 = arith.constant 0 : index
    %c0_0 = arith.constant 0 : index
    %0 = vector.load %arg1[%c0, %c0_0] : memref<8x128xf32, #tpu.memory_space<vmem>>, vector<8x128xf32>
    %c0_1 = arith.constant 0 : index
    %c0_2 = arith.constant 0 : index
    %1 = vector.load %arg2[%c0_1, %c0_2] : memref<8x128xf32, #tpu.memory_space<vmem>>, vector<8x128xf32>
    %c0_3 = arith.constant 0 : index
    %c0_4 = arith.constant 0 : index
    %2 = vector.load %arg3[%c0_3, %c0_4] : memref<8x128xf32, #tpu.memory_space<vmem>>, vector<8x128xf32>
    %3 = arith.addf %0, %2 : vector<8x128xf32>
    %4 = arith.subf %3, %1 : vector<8x128xf32>
    %5 = math.absf %4 : vector<8x128xf32>
    %cst = arith.constant dense<0.000000e+00> : vector<8xf32>
    %6 = vector.multi_reduction <add>, %5, %cst [1] : vector<8x128xf32> to vector<8xf32>
    %7 = vector.shape_cast %6 : vector<8xf32> to vector<8x1xf32>
    %cst_5 = arith.constant 0.000000e+00 : f32
    %8 = vector.broadcast %cst_5 : f32 to vector<8x1xf32>
    %9 = arith.subf %8, %7 : vector<8x1xf32>
    %cst_6 = arith.constant 0.000000e+00 : f32
    %10 = vector.broadcast %cst_6 : f32 to vector<8x1xf32>
    %c0_7 = arith.constant 0 : index
    %c0_8 = arith.constant 0 : index
    %c0_9 = arith.constant 0 : index
    %11 = vector.load %arg4[%c0_7, %c0_8, %c0_9] : memref<4x8x128xf32, #tpu.memory_space<vmem>>, vector<1x8x128xf32>
    %12 = vector.shape_cast %11 : vector<1x8x128xf32> to vector<8x128xf32>
    %13 = arith.addf %12, %2 : vector<8x128xf32>
    %c0_10 = arith.constant 0 : index
    %c0_11 = arith.constant 0 : index
    %c0_12 = arith.constant 0 : index
    %14 = vector.load %arg5[%c0_10, %c0_11, %c0_12] : memref<4x8x128xf32, #tpu.memory_space<vmem>>, vector<1x8x128xf32>
    %15 = vector.shape_cast %14 : vector<1x8x128xf32> to vector<8x128xf32>
    %16 = arith.subf %13, %15 : vector<8x128xf32>
    %17 = math.absf %16 : vector<8x128xf32>
    %cst_13 = arith.constant dense<0.000000e+00> : vector<8xf32>
    %18 = vector.multi_reduction <add>, %17, %cst_13 [1] : vector<8x128xf32> to vector<8xf32>
    %19 = vector.shape_cast %18 : vector<8xf32> to vector<8x1xf32>
    %cst_14 = arith.constant 0.000000e+00 : f32
    %20 = vector.broadcast %cst_14 : f32 to vector<8x1xf32>
    %21 = arith.subf %20, %19 : vector<8x1xf32>
    %cst_15 = arith.constant 1.000000e+00 : f32
    %22 = vector.broadcast %cst_15 : f32 to vector<8x1xf32>
    %23 = arith.subf %22, %9 : vector<8x1xf32>
    %24 = arith.addf %23, %21 : vector<8x1xf32>
    %cst_16 = arith.constant 0.000000e+00 : f32
    %25 = vector.broadcast %cst_16 : f32 to vector<8x1xf32>
    %26 = arith.maximumf %24, %25 : vector<8x1xf32>
    %27 = arith.addf %10, %26 : vector<8x1xf32>
    %c1 = arith.constant 1 : index
    %c0_17 = arith.constant 0 : index
    %c0_18 = arith.constant 0 : index
    %28 = vector.load %arg4[%c1, %c0_17, %c0_18] : memref<4x8x128xf32, #tpu.memory_space<vmem>>, vector<1x8x128xf32>
    %29 = vector.shape_cast %28 : vector<1x8x128xf32> to vector<8x128xf32>
    %30 = arith.addf %29, %2 : vector<8x128xf32>
    %c1_19 = arith.constant 1 : index
    %c0_20 = arith.constant 0 : index
    %c0_21 = arith.constant 0 : index
    %31 = vector.load %arg5[%c1_19, %c0_20, %c0_21] : memref<4x8x128xf32, #tpu.memory_space<vmem>>, vector<1x8x128xf32>
    %32 = vector.shape_cast %31 : vector<1x8x128xf32> to vector<8x128xf32>
    %33 = arith.subf %30, %32 : vector<8x128xf32>
    %34 = math.absf %33 : vector<8x128xf32>
    %cst_22 = arith.constant dense<0.000000e+00> : vector<8xf32>
    %35 = vector.multi_reduction <add>, %34, %cst_22 [1] : vector<8x128xf32> to vector<8xf32>
    %36 = vector.shape_cast %35 : vector<8xf32> to vector<8x1xf32>
    %cst_23 = arith.constant 0.000000e+00 : f32
    %37 = vector.broadcast %cst_23 : f32 to vector<8x1xf32>
    %38 = arith.subf %37, %36 : vector<8x1xf32>
    %cst_24 = arith.constant 1.000000e+00 : f32
    %39 = vector.broadcast %cst_24 : f32 to vector<8x1xf32>
    %40 = arith.subf %39, %9 : vector<8x1xf32>
    %41 = arith.addf %40, %38 : vector<8x1xf32>
    %cst_25 = arith.constant 0.000000e+00 : f32
    %42 = vector.broadcast %cst_25 : f32 to vector<8x1xf32>
    %43 = arith.maximumf %41, %42 : vector<8x1xf32>
    %44 = arith.addf %27, %43 : vector<8x1xf32>
    %c2 = arith.constant 2 : index
    %c0_26 = arith.constant 0 : index
    %c0_27 = arith.constant 0 : index
    %45 = vector.load %arg4[%c2, %c0_26, %c0_27] : memref<4x8x128xf32, #tpu.memory_space<vmem>>, vector<1x8x128xf32>
    %46 = vector.shape_cast %45 : vector<1x8x128xf32> to vector<8x128xf32>
    %47 = arith.addf %46, %2 : vector<8x128xf32>
    %c2_28 = arith.constant 2 : index
    %c0_29 = arith.constant 0 : index
    %c0_30 = arith.constant 0 : index
    %48 = vector.load %arg5[%c2_28, %c0_29, %c0_30] : memref<4x8x128xf32, #tpu.memory_space<vmem>>, vector<1x8x128xf32>
    %49 = vector.shape_cast %48 : vector<1x8x128xf32> to vector<8x128xf32>
    %50 = arith.subf %47, %49 : vector<8x128xf32>
    %51 = math.absf %50 : vector<8x128xf32>
    %cst_31 = arith.constant dense<0.000000e+00> : vector<8xf32>
    %52 = vector.multi_reduction <add>, %51, %cst_31 [1] : vector<8x128xf32> to vector<8xf32>
    %53 = vector.shape_cast %52 : vector<8xf32> to vector<8x1xf32>
    %cst_32 = arith.constant 0.000000e+00 : f32
    %54 = vector.broadcast %cst_32 : f32 to vector<8x1xf32>
    %55 = arith.subf %54, %53 : vector<8x1xf32>
    %cst_33 = arith.constant 1.000000e+00 : f32
    %56 = vector.broadcast %cst_33 : f32 to vector<8x1xf32>
    %57 = arith.subf %56, %9 : vector<8x1xf32>
    %58 = arith.addf %57, %55 : vector<8x1xf32>
    %cst_34 = arith.constant 0.000000e+00 : f32
    %59 = vector.broadcast %cst_34 : f32 to vector<8x1xf32>
    %60 = arith.maximumf %58, %59 : vector<8x1xf32>
    %61 = arith.addf %44, %60 : vector<8x1xf32>
    %c3 = arith.constant 3 : index
    %c0_35 = arith.constant 0 : index
    %c0_36 = arith.constant 0 : index
    %62 = vector.load %arg4[%c3, %c0_35, %c0_36] : memref<4x8x128xf32, #tpu.memory_space<vmem>>, vector<1x8x128xf32>
    %63 = vector.shape_cast %62 : vector<1x8x128xf32> to vector<8x128xf32>
    %64 = arith.addf %63, %2 : vector<8x128xf32>
    %c3_37 = arith.constant 3 : index
    %c0_38 = arith.constant 0 : index
    %c0_39 = arith.constant 0 : index
    %65 = vector.load %arg5[%c3_37, %c0_38, %c0_39] : memref<4x8x128xf32, #tpu.memory_space<vmem>>, vector<1x8x128xf32>
    %66 = vector.shape_cast %65 : vector<1x8x128xf32> to vector<8x128xf32>
    %67 = arith.subf %64, %66 : vector<8x128xf32>
    %68 = math.absf %67 : vector<8x128xf32>
    %cst_40 = arith.constant dense<0.000000e+00> : vector<8xf32>
    %69 = vector.multi_reduction <add>, %68, %cst_40 [1] : vector<8x128xf32> to vector<8xf32>
    %70 = vector.shape_cast %69 : vector<8xf32> to vector<8x1xf32>
    %cst_41 = arith.constant 0.000000e+00 : f32
    %71 = vector.broadcast %cst_41 : f32 to vector<8x1xf32>
    %72 = arith.subf %71, %70 : vector<8x1xf32>
    %cst_42 = arith.constant 1.000000e+00 : f32
    %73 = vector.broadcast %cst_42 : f32 to vector<8x1xf32>
    %74 = arith.subf %73, %9 : vector<8x1xf32>
    %75 = arith.addf %74, %72 : vector<8x1xf32>
    %cst_43 = arith.constant 0.000000e+00 : f32
    %76 = vector.broadcast %cst_43 : f32 to vector<8x1xf32>
    %77 = arith.maximumf %75, %76 : vector<8x1xf32>
    %78 = arith.addf %61, %77 : vector<8x1xf32>
    %c0_44 = arith.constant 0 : index
    %c0_45 = arith.constant 0 : index
    %79 = vector.load %arg6[%c0_44, %c0_45] : memref<8x1xf32, #tpu.memory_space<vmem>>, vector<8x1xf32>
    tpu.vector_store %arg6[%c0_44, %c0_45], %78 {strides = array<i32>} : memref<8x1xf32, #tpu.memory_space<vmem>>, vector<8x1xf32>,
    %80 = arith.mulf %0, %0 : vector<8x128xf32>
    %81 = arith.mulf %1, %1 : vector<8x128xf32>
    %82 = arith.addf %80, %81 : vector<8x128xf32>
    %83 = arith.mulf %2, %2 : vector<8x128xf32>
    %84 = arith.addf %82, %83 : vector<8x128xf32>
    %cst_46 = arith.constant dense<0.000000e+00> : vector<8xf32>
    %85 = vector.multi_reduction <add>, %84, %cst_46 [1] : vector<8x128xf32> to vector<8xf32>
    %86 = vector.shape_cast %85 : vector<8xf32> to vector<8x1xf32>
    %c0_47 = arith.constant 0 : index
    %c0_48 = arith.constant 0 : index
    %87 = vector.load %arg7[%c0_47, %c0_48] : memref<8x1xf32, #tpu.memory_space<vmem>>, vector<8x1xf32>
    tpu.vector_store %arg7[%c0_47, %c0_48], %86 {strides = array<i32>} : memref<8x1xf32, #tpu.memory_space<vmem>>, vector<8x1xf32>,
    return
  }
  func.func @transform_0(%arg0: i32) -> (i32, i32) {
    %c0_i32 = arith.constant 0 : i32
    %c0_i32_0 = arith.constant 0 : i32
    return %arg0, %c0_i32 : i32, i32
  }
  func.func @transform_1(%arg0: i32) -> (i32, i32) {
    %c0_i32 = arith.constant 0 : i32
    %c0_i32_0 = arith.constant 0 : i32
    return %arg0, %c0_i32 : i32, i32
  }
  func.func @transform_2(%arg0: i32) -> (i32, i32) {
    %c0_i32 = arith.constant 0 : i32
    %c0_i32_0 = arith.constant 0 : i32
    return %arg0, %c0_i32 : i32, i32
  }
  func.func @transform_3(%arg0: i32) -> (i32, i32, i32) {
    %c0_i32 = arith.constant 0 : i32
    %c0_i32_0 = arith.constant 0 : i32
    %c0_i32_1 = arith.constant 0 : i32
    return %c0_i32, %arg0, %c0_i32_0 : i32, i32, i32
  }
  func.func @transform_4(%arg0: i32) -> (i32, i32, i32) {
    %c0_i32 = arith.constant 0 : i32
    %c0_i32_0 = arith.constant 0 : i32
    %c0_i32_1 = arith.constant 0 : i32
    return %c0_i32, %arg0, %c0_i32_0 : i32, i32, i32
  }
  func.func @transform_5(%arg0: i32) -> (i32, i32) {
    %c0_i32 = arith.constant 0 : i32
    %c0_i32_0 = arith.constant 0 : i32
    return %arg0, %c0_i32 : i32, i32
  }
  func.func @transform_6(%arg0: i32) -> (i32, i32) {
    %c0_i32 = arith.constant 0 : i32
    %c0_i32_0 = arith.constant 0 : i32
    return %arg0, %c0_i32 : i32, i32
  }
}

</mosaic_0001>

<llo_original>
// kernel: compute_loss_pallas.1
$region0: #{compute_loss_pallas.1}
  #allocation0 [shape = 'u32[]', space=smem, size = 0x4, offset = 0x4, fixed_abs, tag = 'smem constant byte address 0x4 - core index']
  #allocation1 [shape = 'u32[144,128]{1,0:T(1,128)}', space=vmem, size = 0x12000, scoped, tag = 'internal scratch']
  %s0 = inlined_call_operand.vmem [shape: f32[16,128], index: 0, kind: input, shape index: {}]
  %s1 = inlined_call_operand.vmem [shape: f32[16,128], index: 1, kind: input, shape index: {}]
  %s2 = inlined_call_operand.vmem [shape: f32[16,128], index: 2, kind: input, shape index: {}]
  %s3 = inlined_call_operand.vmem [shape: f32[4,16,128], index: 3, kind: input, shape index: {}]
  %s4 = inlined_call_operand.vmem [shape: f32[4,16,128], index: 4, kind: input, shape index: {}]
  %s5 = inlined_call_operand.vmem [shape: f32[16,1], index: 5, kind: output, shape index: {0}]
  %s6 = inlined_call_operand.vmem [shape: f32[16,1], index: 6, kind: output, shape index: {1}]
  %7 = xla_tuple %s5, %s6
  %s8 = sld [smem:[#allocation0]]
  $region137: #{compute_loss_pallas.1} parent=0
    _
  %s10 = ssub.s32 1, %s8
  %s11 = scalar_select 0, %s10, %s8
  $region1: #{compute_loss_pallas.1} parent=0
    #allocation2 [shape = 'u8[32768]{0}', space=vmem, size = 0x8000, scoped, tag = 'input window, operand 3']
    #allocation3 [shape = 'u8[32768]{0}', space=vmem, size = 0x8000, scoped, tag = 'input window, operand 4']
    loop: start=0, step=1, limit=4
    $region2: #{compute_loss_pallas.1} parent=1 // loop_pre_header
      _
    $region3: #{compute_loss_pallas.1} parent=1 // loop_header
      %s13 = sphi 0, %s17
      %p14 = scmp.ge.s32.totalorder %s13, 4
      %s23 = sphi 0, %s25
      %s26 = sphi 0, %s23
      %s27 = sphi 0, %s26
      %s43 = sphi 0, %s27
      %s49 = sphi 0, %s51
      %s52 = sphi 0, %s49
      %s53 = sphi 0, %s52
      %s69 = sphi 0, %s53
      %s75 = sphi 0, %s77
      %s78 = sphi 0, %s75
      %s79 = sphi 0, %s78
      %s95 = sphi 0, %s79
      %s101 = sphi 0, %s103
      %s104 = sphi 0, %s101
      %s105 = sphi 0, %s104
      %s121 = sphi 0, %s105
      %s127 = sphi 0, %s129
      %s130 = sphi 0, %s127
      %s131 = sphi 0, %s130
      %s147 = sphi 0, %s131
      %s153 = sphi 0, %s155
      %s156 = sphi 0, %s153
      %s157 = sphi 0, %s156
      %s173 = sphi 0, %s157
      %s179 = sphi 0, %s181
      %s182 = sphi 0, %s179
      %s183 = sphi 0, %s182
      %s199 = sphi 0, %s183
    $region4: #{compute_loss_pallas.1} parent=1 // loop_header_branch
      %16 = sbr.rel (%p14) target = $region8
    $region5: #{compute_loss_pallas.1} parent=1 // loop_body
      %s18 = ssub.s32 %s13, 1
      %s19 = ssub.s32 %s13, 2
      %s20 = sadd.s32 %s13, 1
      %s21 = ssub.s32 %s13, %s20
      %p22 = scmp.eq.s32.totalorder %s21, 0
      %s24 = sadd.s32 %s23, 1
      %s25 = scalar_select %p22, %s23, %s24
      %p28 = pneg %p22
      %p29 = scmp.eq.s32.totalorder %s13, 1
      %p30 = por %p28, %p29
      %p31 = scmp.ne.s32.totalorder %s23, %s26
      %p32 = scmp.eq.s32.totalorder %s13, 0
      %p33 = por %p31, %p32
      %p34 = scmp.ne.s32.totalorder %s23, %s26
      %p35 = scmp.eq.s32.totalorder %s18, 1
      %p36 = por %p34, %p35
      %p37 = scmp.ne.s32.totalorder %s26, %s27
      %p38 = scmp.eq.s32.totalorder %s18, 0
      %p39 = por %p37, %p38
      %p40 = scmp.ne.s32.totalorder %s26, %s27
      %p41 = scmp.eq.s32.totalorder %s19, 1
      %p42 = por %p40, %p41
      %p44 = scmp.ne.s32.totalorder %s27, %s43
      %p45 = scmp.eq.s32.totalorder %s19, 0
      %p46 = por %p44, %p45
      %s47 = ssub.s32 %s13, %s20
      %p48 = scmp.eq.s32.totalorder %s47, 0
      %s50 = sadd.s32 %s49, 1
      %s51 = scalar_select %p48, %s49, %s50
      %p54 = pneg %p48
      %p55 = scmp.eq.s32.totalorder %s13, 1
      %p56 = por %p54, %p55
      %p57 = scmp.ne.s32.totalorder %s49, %s52
      %p58 = scmp.eq.s32.totalorder %s13, 0
      %p59 = por %p57, %p58
      %p60 = scmp.ne.s32.totalorder %s49, %s52
      %p61 = scmp.eq.s32.totalorder %s18, 1
      %p62 = por %p60, %p61
      %p63 = scmp.ne.s32.totalorder %s52, %s53
      %p64 = scmp.eq.s32.totalorder %s18, 0
      %p65 = por %p63, %p64
      %p66 = scmp.ne.s32.totalorder %s52, %s53
      %p67 = scmp.eq.s32.totalorder %s19, 1
      %p68 = por %p66, %p67
      %p70 = scmp.ne.s32.totalorder %s53, %s69
      %p71 = scmp.eq.s32.totalorder %s19, 0
      %p72 = por %p70, %p71
      %s73 = ssub.s32 %s13, %s20
      %p74 = scmp.eq.s32.totalorder %s73, 0
      %s76 = sadd.s32 %s75, 1
      %s77 = scalar_select %p74, %s75, %s76
      %p80 = pneg %p74
      %p81 = scmp.eq.s32.totalorder %s13, 1
      %p82 = por %p80, %p81
      %p83 = scmp.ne.s32.totalorder %s75, %s78
      %p84 = scmp.eq.s32.totalorder %s13, 0
      %p85 = por %p83, %p84
      %p86 = scmp.ne.s32.totalorder %s75, %s78
      %p87 = scmp.eq.s32.totalorder %s18, 1
      %p88 = por %p86, %p87
      %p89 = scmp.ne.s32.totalorder %s78, %s79
      %p90 = scmp.eq.s32.totalorder %s18, 0
      %p91 = por %p89, %p90
      %p92 = scmp.ne.s32.totalorder %s78, %s79
      %p93 = scmp.eq.s32.totalorder %s19, 1
      %p94 = por %p92, %p93
      %p96 = scmp.ne.s32.totalorder %s79, %s95
      %p97 = scmp.eq.s32.totalorder %s19, 0
      %p98 = por %p96, %p97
      %s99 = ssub.s32 %s13, %s20
      %p100 = scmp.eq.s32.totalorder %s99, 0
      %s102 = sadd.s32 %s101, 1
      %s103 = scalar_select %p100, %s101, %s102
      %p106 = pneg %p100
      %p107 = scmp.eq.s32.totalorder %s13, 1
      %p108 = por %p106, %p107
      %p109 = scmp.ne.s32.totalorder %s101, %s104
      %p110 = scmp.eq.s32.totalorder %s13, 0
      %p111 = por %p109, %p110
      %p112 = scmp.ne.s32.totalorder %s101, %s104
      %p113 = scmp.eq.s32.totalorder %s18, 1
      %p114 = por %p112, %p113
      %p115 = scmp.ne.s32.totalorder %s104, %s105
      %p116 = scmp.eq.s32.totalorder %s18, 0
      %p117 = por %p115, %p116
      %p118 = scmp.ne.s32.totalorder %s104, %s105
      %p119 = scmp.eq.s32.totalorder %s19, 1
      %p120 = por %p118, %p119
      %p122 = scmp.ne.s32.totalorder %s105, %s121
      %p123 = scmp.eq.s32.totalorder %s19, 0
      %p124 = por %p122, %p123
      %s125 = ssub.s32 %s13, %s20
      %p126 = scmp.eq.s32.totalorder %s125, 0
      %s128 = sadd.s32 %s127, 1
      %s129 = scalar_select %p126, %s127, %s128
      %p132 = pneg %p126
      %p133 = scmp.eq.s32.totalorder %s13, 1
      %p134 = por %p132, %p133
      %p135 = scmp.ne.s32.totalorder %s127, %s130
      %p136 = scmp.eq.s32.totalorder %s13, 0
      %p137 = por %p135, %p136
      %p138 = scmp.ne.s32.totalorder %s127, %s130
      %p139 = scmp.eq.s32.totalorder %s18, 1
      %p140 = por %p138, %p139
      %p141 = scmp.ne.s32.totalorder %s130, %s131
      %p142 = scmp.eq.s32.totalorder %s18, 0
      %p143 = por %p141, %p142
      %p144 = scmp.ne.s32.totalorder %s130, %s131
      %p145 = scmp.eq.s32.totalorder %s19, 1
      %p146 = por %p144, %p145
      %p148 = scmp.ne.s32.totalorder %s131, %s147
      %p149 = scmp.eq.s32.totalorder %s19, 0
      %p150 = por %p148, %p149
      %s151 = ssub.s32 %s13, %s20
      %p152 = scmp.eq.s32.totalorder %s151, 0
      %s154 = sadd.s32 %s153, 1
      %s155 = scalar_select %p152, %s153, %s154
      %p158 = pneg %p152
      %p159 = scmp.eq.s32.totalorder %s13, 1
      %p160 = por %p158, %p159
      %p161 = scmp.ne.s32.totalorder %s153, %s156
      %p162 = scmp.eq.s32.totalorder %s13, 0
      %p163 = por %p161, %p162
      %p164 = scmp.ne.s32.totalorder %s153, %s156
      %p165 = scmp.eq.s32.totalorder %s18, 1
      %p166 = por %p164, %p165
      %p167 = scmp.ne.s32.totalorder %s156, %s157
      %p168 = scmp.eq.s32.totalorder %s18, 0
      %p169 = por %p167, %p168
      %p170 = scmp.ne.s32.totalorder %s156, %s157
      %p171 = scmp.eq.s32.totalorder %s19, 1
      %p172 = por %p170, %p171
      %p174 = scmp.ne.s32.totalorder %s157, %s173
      %p175 = scmp.eq.s32.totalorder %s19, 0
      %p176 = por %p174, %p175
      %s177 = ssub.s32 %s13, %s20
      %p178 = scmp.eq.s32.totalorder %s177, 0
      %s180 = sadd.s32 %s179, 1
      %s181 = scalar_select %p178, %s179, %s180
      %p184 = pneg %p178
      %p185 = scmp.eq.s32.totalorder %s13, 1
      %p186 = por %p184, %p185
      %p187 = scmp.ne.s32.totalorder %s179, %s182
      %p188 = scmp.eq.s32.totalorder %s13, 0
      %p189 = por %p187, %p188
      %p190 = scmp.ne.s32.totalorder %s179, %s182
      %p191 = scmp.eq.s32.totalorder %s18, 1
      %p192 = por %p190, %p191
      %p193 = scmp.ne.s32.totalorder %s182, %s183
      %p194 = scmp.eq.s32.totalorder %s18, 0
      %p195 = por %p193, %p194
      %p196 = scmp.ne.s32.totalorder %s182, %s183
      %p197 = scmp.eq.s32.totalorder %s19, 1
      %p198 = por %p196, %p197
      %p200 = scmp.ne.s32.totalorder %s183, %s199
      %p201 = scmp.eq.s32.totalorder %s19, 0
      %p202 = por %p200, %p201
      %p203 = scmp.le.s32.totalorder 1, %s13
      %p204 = scmp.lt.s32.totalorder %s13, 3
      %p205 = pnand %p203, %p204
      %p206 = pneg %p205
      // Predicated region
      $region9: #{compute_loss_pallas.1} parent=5 // pred_check
        _
      $region10: #{compute_loss_pallas.1} parent=5 // pred_check_branch
        %208 = sbr.rel (%p205) target = $region12
      $region11: #{compute_loss_pallas.1} parent=5 // pred_region
        %s209 = ssub.s32 %s13, 1
      $region12: #{compute_loss_pallas.1} parent=5 // pred_fallthru
        _
      %p210 = scmp.lt.s32.totalorder %s13, 2
      // Predicated region
      $region13: #{compute_loss_pallas.1} parent=5 // pred_check
        %p211 = pneg %p210
      $region14: #{compute_loss_pallas.1} parent=5 // pred_check_branch
        %213 = sbr.rel (%p211) target = $region16
      $region15: #{compute_loss_pallas.1} parent=5 // pred_region
        // Predicated region
        $region17: #{compute_loss_pallas.1} parent=15 // pred_check
          %p214 = pneg %p33
        $region18: #{compute_loss_pallas.1} parent=15 // pred_check_branch
          %216 = sbr.rel (%p214) target = $region20
        $region19: #{compute_loss_pallas.1} parent=15 // pred_region
          %p217 = scmp.lt.s32.totalorder %s13, 1
          %s218 = scalar_select %p217, %s13, 1
          %s219 = smul.addr %s218, 8
          %s220 = scalar_lea.vmem %s0, %s219
        $region20: #{compute_loss_pallas.1} parent=15 // pred_fallthru
          _
        // Predicated region
        $region21: #{compute_loss_pallas.1} parent=15 // pred_check
          %p221 = pneg %p59
        $region22: #{compute_loss_pallas.1} parent=15 // pred_check_branch
          %223 = sbr.rel (%p221) target = $region24
        $region23: #{compute_loss_pallas.1} parent=15 // pred_region
          %p224 = scmp.lt.s32.totalorder %s13, 1
          %s225 = scalar_select %p224, %s13, 1
          %s226 = smul.addr %s225, 8
          %s227 = scalar_lea.vmem %s1, %s226
        $region24: #{compute_loss_pallas.1} parent=15 // pred_fallthru
          _
        // Predicated region
        $region25: #{compute_loss_pallas.1} parent=15 // pred_check
          %p228 = pneg %p85
        $region26: #{compute_loss_pallas.1} parent=15 // pred_check_branch
          %230 = sbr.rel (%p228) target = $region28
        $region27: #{compute_loss_pallas.1} parent=15 // pred_region
          %p231 = scmp.lt.s32.totalorder %s13, 1
          %s232 = scalar_select %p231, %s13, 1
          %s233 = smul.addr %s232, 8
          %s234 = scalar_lea.vmem %s2, %s233
        $region28: #{compute_loss_pallas.1} parent=15 // pred_fallthru
          _
        // Predicated region
        $region29: #{compute_loss_pallas.1} parent=15 // pred_check
          %p235 = pneg %p111
        $region30: #{compute_loss_pallas.1} parent=15 // pred_check_branch
          %237 = sbr.rel (%p235) target = $region32
        $region31: #{compute_loss_pallas.1} parent=15 // pred_region
          %s238 = sand.u32 %s101, 1
          %s239 = sand.u32 %s101, 1
          %s240 = smul.addr %s239, 32
          %s241 = scalar_lea.vmem [#allocation2], %s240
          %s242 = smul.addr %s13, 8
          %s243 = scalar_lea.vmem %s3, %s242
          // Predicated region
          $region33: #{compute_loss_pallas.1} parent=31 // pred_check
            _
          $region34: #{compute_loss_pallas.1} parent=31 // pred_check_branch
            %245 = sbr.rel (0) target = $region36
          $region35: #{compute_loss_pallas.1} parent=31 // pred_region
            // Predicated region
            $region37: #{compute_loss_pallas.1} parent=35 // pred_check
              _
            $region38: #{compute_loss_pallas.1} parent=35 // pred_check_branch
              %247 = sbr.rel (0) target = $region40
            $region39: #{compute_loss_pallas.1} parent=35 // pred_region
              // Predicated region
              $region52: #{compute_loss_pallas.1} parent=39 // pred_check
                _
              $region53: #{compute_loss_pallas.1} parent=39 // pred_check_branch
                %268 = sbr.rel (0) target = $region55
              $region54: #{compute_loss_pallas.1} parent=39 // pred_region
                loop: start=0, step=1, limit=1
                $region56: #{compute_loss_pallas.1} parent=54 // loop_pre_header
                  _
                $region57: #{compute_loss_pallas.1} parent=54 // loop_header
                  %s270 = sphi 0, %s274
                  %p271 = scmp.ge.s32.totalorder %s270, 1
                  %s275 = sphi %s243, %s243
                  %s276 = sphi %s241, %s241
                $region58: #{compute_loss_pallas.1} parent=54 // loop_header_branch
                  %273 = sbr.rel (%p271) target = $region62
                $region59: #{compute_loss_pallas.1} parent=54 // loop_body
                  %v277 = vld [vmem:[%s275] sm:$0xff]
                  %278 = vst [vmem:[%s276] sm:$0xff] %v277
                  %v279 = vld [vmem:[%s275 + $0x10] sm:$0xff]
                  %280 = vst [vmem:[%s276 + $0x8] sm:$0xff] %v279
                  %v281 = vld [vmem:[%s275 + $0x20] sm:$0xff]
                  %282 = vst [vmem:[%s276 + $0x10] sm:$0xff] %v281
                  %v283 = vld [vmem:[%s275 + $0x30] sm:$0xff]
                  %284 = vst [vmem:[%s276 + $0x18] sm:$0xff] %v283
                $region60: #{compute_loss_pallas.1} parent=54 // loop_footer
                  %s274 = sadd.s32 1, %s270
                $region61: #{compute_loss_pallas.1} parent=54 // loop_footer_branch
                  %269 = sbr.rel target = $region57
                $region62: #{compute_loss_pallas.1} parent=54 // loop_exit
                  _
              $region55: #{compute_loss_pallas.1} parent=39 // pred_fallthru
                _
              // Predicated region
              $region63: #{compute_loss_pallas.1} parent=39 // pred_check
                _
              $region64: #{compute_loss_pallas.1} parent=39 // pred_check_branch
                %286 = sbr.rel target = $region66
              $region65: #{compute_loss_pallas.1} parent=39 // pred_region
                _
              $region66: #{compute_loss_pallas.1} parent=39 // pred_fallthru
                _
            $region40: #{compute_loss_pallas.1} parent=35 // pred_fallthru
              _
            // Predicated region
            $region41: #{compute_loss_pallas.1} parent=35 // pred_check
              _
            $region42: #{compute_loss_pallas.1} parent=35 // pred_check_branch
              %249 = sbr.rel target = $region44
            $region43: #{compute_loss_pallas.1} parent=35 // pred_region
              loop: start=0, step=1, limit=1
              $region45: #{compute_loss_pallas.1} parent=43 // loop_pre_header
                _
              $region46: #{compute_loss_pallas.1} parent=43 // loop_header
                %s252 = sphi 0, %s256
                %p253 = scmp.ge.s32.totalorder %s252, 1
                %s257 = sphi %s243, %s243
                %s258 = sphi %s241, %s241
              $region47: #{compute_loss_pallas.1} parent=43 // loop_header_branch
                %255 = sbr.rel (%p253) target = $region51
              $region48: #{compute_loss_pallas.1} parent=43 // loop_body
                %v259 = vld [vmem:[%s257] sm:$0xff]
                %260 = vst [vmem:[%s258] sm:$0xff] %v259
                %v261 = vld [vmem:[%s257 + $0x10] sm:$0xff]
                %262 = vst [vmem:[%s258 + $0x8] sm:$0xff] %v261
                %v263 = vld [vmem:[%s257 + $0x20] sm:$0xff]
                %264 = vst [vmem:[%s258 + $0x10] sm:$0xff] %v263
                %v265 = vld [vmem:[%s257 + $0x30] sm:$0xff]
                %266 = vst [vmem:[%s258 + $0x18] sm:$0xff] %v265
              $region49: #{compute_loss_pallas.1} parent=43 // loop_footer
                %s256 = sadd.s32 1, %s252
              $region50: #{compute_loss_pallas.1} parent=43 // loop_footer_branch
                %251 = sbr.rel target = $region46
              $region51: #{compute_loss_pallas.1} parent=43 // loop_exit
                _
            $region44: #{compute_loss_pallas.1} parent=35 // pred_fallthru
              _
          $region36: #{compute_loss_pallas.1} parent=31 // pred_fallthru
            _
          %287 = vnop
        $region32: #{compute_loss_pallas.1} parent=15 // pred_fallthru
          _
        // Predicated region
        $region67: #{compute_loss_pallas.1} parent=15 // pred_check
          %p288 = pneg %p137
        $region68: #{compute_loss_pallas.1} parent=15 // pred_check_branch
          %290 = sbr.rel (%p288) target = $region70
        $region69: #{compute_loss_pallas.1} parent=15 // pred_region
          %s291 = sand.u32 %s127, 1
          %s292 = sand.u32 %s127, 1
          %s293 = smul.addr %s292, 32
          %s294 = scalar_lea.vmem [#allocation3], %s293
          %s295 = smul.addr %s13, 8
          %s296 = scalar_lea.vmem %s4, %s295
          // Predicated region
          $region71: #{compute_loss_pallas.1} parent=69 // pred_check
            _
          $region72: #{compute_loss_pallas.1} parent=69 // pred_check_branch
            %298 = sbr.rel (0) target = $region74
          $region73: #{compute_loss_pallas.1} parent=69 // pred_region
            // Predicated region
            $region75: #{compute_loss_pallas.1} parent=73 // pred_check
              _
            $region76: #{compute_loss_pallas.1} parent=73 // pred_check_branch
              %300 = sbr.rel (0) target = $region78
            $region77: #{compute_loss_pallas.1} parent=73 // pred_region
              // Predicated region
              $region90: #{compute_loss_pallas.1} parent=77 // pred_check
                _
              $region91: #{compute_loss_pallas.1} parent=77 // pred_check_branch
                %321 = sbr.rel (0) target = $region93
              $region92: #{compute_loss_pallas.1} parent=77 // pred_region
                loop: start=0, step=1, limit=1
                $region94: #{compute_loss_pallas.1} parent=92 // loop_pre_header
                  _
                $region95: #{compute_loss_pallas.1} parent=92 // loop_header
                  %s323 = sphi 0, %s327
                  %p324 = scmp.ge.s32.totalorder %s323, 1
                  %s328 = sphi %s296, %s296
                  %s329 = sphi %s294, %s294
                $region96: #{compute_loss_pallas.1} parent=92 // loop_header_branch
                  %326 = sbr.rel (%p324) target = $region100
                $region97: #{compute_loss_pallas.1} parent=92 // loop_body
                  %v330 = vld [vmem:[%s328] sm:$0xff]
                  %331 = vst [vmem:[%s329] sm:$0xff] %v330
                  %v332 = vld [vmem:[%s328 + $0x10] sm:$0xff]
                  %333 = vst [vmem:[%s329 + $0x8] sm:$0xff] %v332
                  %v334 = vld [vmem:[%s328 + $0x20] sm:$0xff]
                  %335 = vst [vmem:[%s329 + $0x10] sm:$0xff] %v334
                  %v336 = vld [vmem:[%s328 + $0x30] sm:$0xff]
                  %337 = vst [vmem:[%s329 + $0x18] sm:$0xff] %v336
                $region98: #{compute_loss_pallas.1} parent=92 // loop_footer
                  %s327 = sadd.s32 1, %s323
                $region99: #{compute_loss_pallas.1} parent=92 // loop_footer_branch
                  %322 = sbr.rel target = $region95
                $region100: #{compute_loss_pallas.1} parent=92 // loop_exit
                  _
              $region93: #{compute_loss_pallas.1} parent=77 // pred_fallthru
                _
              // Predicated region
              $region101: #{compute_loss_pallas.1} parent=77 // pred_check
                _
              $region102: #{compute_loss_pallas.1} parent=77 // pred_check_branch
                %339 = sbr.rel target = $region104
              $region103: #{compute_loss_pallas.1} parent=77 // pred_region
                _
              $region104: #{compute_loss_pallas.1} parent=77 // pred_fallthru
                _
            $region78: #{compute_loss_pallas.1} parent=73 // pred_fallthru
              _
            // Predicated region
            $region79: #{compute_loss_pallas.1} parent=73 // pred_check
              _
            $region80: #{compute_loss_pallas.1} parent=73 // pred_check_branch
              %302 = sbr.rel target = $region82
            $region81: #{compute_loss_pallas.1} parent=73 // pred_region
              loop: start=0, step=1, limit=1
              $region83: #{compute_loss_pallas.1} parent=81 // loop_pre_header
                _
              $region84: #{compute_loss_pallas.1} parent=81 // loop_header
                %s305 = sphi 0, %s309
                %p306 = scmp.ge.s32.totalorder %s305, 1
                %s310 = sphi %s296, %s296
                %s311 = sphi %s294, %s294
              $region85: #{compute_loss_pallas.1} parent=81 // loop_header_branch
                %308 = sbr.rel (%p306) target = $region89
              $region86: #{compute_loss_pallas.1} parent=81 // loop_body
                %v312 = vld [vmem:[%s310] sm:$0xff]
                %313 = vst [vmem:[%s311] sm:$0xff] %v312
                %v314 = vld [vmem:[%s310 + $0x10] sm:$0xff]
                %315 = vst [vmem:[%s311 + $0x8] sm:$0xff] %v314
                %v316 = vld [vmem:[%s310 + $0x20] sm:$0xff]
                %317 = vst [vmem:[%s311 + $0x10] sm:$0xff] %v316
                %v318 = vld [vmem:[%s310 + $0x30] sm:$0xff]
                %319 = vst [vmem:[%s311 + $0x18] sm:$0xff] %v318
              $region87: #{compute_loss_pallas.1} parent=81 // loop_footer
                %s309 = sadd.s32 1, %s305
              $region88: #{compute_loss_pallas.1} parent=81 // loop_footer_branch
                %304 = sbr.rel target = $region84
              $region89: #{compute_loss_pallas.1} parent=81 // loop_exit
                _
            $region82: #{compute_loss_pallas.1} parent=73 // pred_fallthru
              _
          $region74: #{compute_loss_pallas.1} parent=69 // pred_fallthru
            _
          %340 = vnop
        $region70: #{compute_loss_pallas.1} parent=15 // pred_fallthru
          _
      $region16: #{compute_loss_pallas.1} parent=5 // pred_fallthru
        _
      %p341 = scmp.le.s32.totalorder 1, %s13
      %p342 = scmp.lt.s32.totalorder %s13, 3
      %p343 = pnand %p341, %p342
      %p344 = pneg %p343
      // Predicated region
      $region105: #{compute_loss_pallas.1} parent=5 // pred_check
        _
      $region106: #{compute_loss_pallas.1} parent=5 // pred_check_branch
        %346 = sbr.rel (%p343) target = $region108
      $region107: #{compute_loss_pallas.1} parent=5 // pred_region
        %s347 = ssub.s32 %s13, 1
        %s348 = sand.u32 %s104, 1
        %s349 = sand.u32 %s104, 1
        %s350 = smul.addr %s349, 32
        %s351 = scalar_lea.vmem [#allocation2], %s350
        // Predicated region
        $region109: #{compute_loss_pallas.1} parent=107 // pred_check
          %p352 = pneg %p117
        $region110: #{compute_loss_pallas.1} parent=107 // pred_check_branch
          %354 = sbr.rel (%p352) target = $region112
        $region111: #{compute_loss_pallas.1} parent=107 // pred_region
          _
        $region112: #{compute_loss_pallas.1} parent=107 // pred_fallthru
          _
        %s355 = sand.u32 %s130, 1
        %s356 = sand.u32 %s130, 1
        %s357 = smul.addr %s356, 32
        %s358 = scalar_lea.vmem [#allocation3], %s357
        // Predicated region
        $region113: #{compute_loss_pallas.1} parent=107 // pred_check
          %p359 = pneg %p143
        $region114: #{compute_loss_pallas.1} parent=107 // pred_check_branch
          %361 = sbr.rel (%p359) target = $region116
        $region115: #{compute_loss_pallas.1} parent=107 // pred_region
          _
        $region116: #{compute_loss_pallas.1} parent=107 // pred_fallthru
          _
        %p362 = scmp.lt.s32.totalorder %s18, 1
        %s363 = scalar_select %p362, %s18, 1
        %s364 = smul.addr %s363, 8
        %s365 = scalar_lea.vmem %s0, %s364
        %p366 = pneg %p39
        %p367 = pneg %p36
        %p368 = scmp.lt.s32.totalorder %s18, 1
        %s369 = scalar_select %p368, %s18, 1
        %s370 = smul.addr %s369, 8
        %s371 = scalar_lea.vmem %s1, %s370
        %p372 = pneg %p65
        %p373 = pneg %p62
        %p374 = scmp.lt.s32.totalorder %s18, 1
        %s375 = scalar_select %p374, %s18, 1
        %s376 = smul.addr %s375, 8
        %s377 = scalar_lea.vmem %s2, %s376
        %p378 = pneg %p91
        %p379 = pneg %p88
        %s380 = sand.u32 %s104, 1
        %s381 = sand.u32 %s104, 1
        %s382 = smul.addr %s381, 32
        %s383 = scalar_lea.vmem [#allocation2], %s382
        %p384 = pneg %p117
        %p385 = pneg %p114
        %s386 = sand.u32 %s130, 1
        %s387 = sand.u32 %s130, 1
        %s388 = smul.addr %s387, 32
        %s389 = scalar_lea.vmem [#allocation3], %s388
        %p390 = pneg %p143
        %p391 = pneg %p140
        %p392 = pneg %p169
        %p393 = pneg %p166
        %p394 = scmp.lt.s32.totalorder %s18, 1
        %s395 = scalar_select %p394, %s18, 1
        %s396 = smul.addr %s395, 8
        %s397 = scalar_lea.vmem %s5, %s396
        %p398 = pneg %p195
        %p399 = pneg %p192
        %p400 = scmp.lt.s32.totalorder %s18, 1
        %s401 = scalar_select %p400, %s18, 1
        %s402 = smul.addr %s401, 8
        %s403 = scalar_lea.vmem %s6, %s402
        %p404 = scmp.lt.s32.totalorder %s18, 1
        %s405 = scalar_select %p404, %s18, 1
        %s406 = smul.addr %s405, 8
        %s407 = scalar_lea.vmem %s0, %s406
        %p408 = scmp.lt.s32.totalorder %s18, 1
        %s409 = scalar_select %p408, %s18, 1
        %s410 = smul.addr %s409, 8
        %s411 = scalar_lea.vmem %s1, %s410
        %p412 = scmp.lt.s32.totalorder %s18, 1
        %s413 = scalar_select %p412, %s18, 1
        %s414 = smul.addr %s413, 8
        %s415 = scalar_lea.vmem %s2, %s414
        %p416 = scmp.lt.s32.totalorder %s18, 1
        %s417 = scalar_select %p416, %s18, 1
        %s418 = smul.addr %s417, 8
        %s419 = scalar_lea.vmem %s5, %s418
        %p420 = scmp.lt.s32.totalorder %s18, 1
        %s421 = scalar_select %p420, %s18, 1
        %s422 = smul.addr %s421, 8
        %s423 = scalar_lea.vmem %s6, %s422
        %v424 = vld [vmem:[%s407] sm:$0xff]
        %v425 = vld [vmem:[%s411] sm:$0xff]
        %v426 = vld [vmem:[%s415] sm:$0xff]
        %v427 = vadd.f32 %v424, %v426
        %v428 = vsub.f32 %v427, %v425
        %v429 = vand.u32 2147483647, %v428
        %430 = vadd.xlane.f32.xlu0 %v429
        %v431 = vpop.xlane.xlu0 %430
        %v432 = vsub.f32 0.0, %v431
        %v433 = vld [vmem:[%s351] sm:$0xff]
        %v434 = vadd.f32 %v433, %v426
        %v435 = vld [vmem:[%s358] sm:$0xff]
        %v436 = vsub.f32 %v434, %v435
        %v437 = vand.u32 2147483647, %v436
        %438 = vadd.xlane.f32.xlu0 %v437
        %v439 = vpop.xlane.xlu0 %438
        %v440 = vsub.f32 0.0, %v439
        %v441 = vsub.f32 1.0, %v432
        %v442 = vadd.f32 %v441, %v440
        %v443 = vmax.f32 %v442, 0.0
        %v444 = vadd.f32 %v443, 0.0
        %s445 = scalar_lea.vmem %s351, 8 [#allocation2]
        %v446 = vld [vmem:[%s445] sm:$0xff]
        %v447 = vadd.f32 %v446, %v426
        %s448 = scalar_lea.vmem %s358, 8 [#allocation3]
        %v449 = vld [vmem:[%s448] sm:$0xff]
        %v450 = vsub.f32 %v447, %v449
        %v451 = vand.u32 2147483647, %v450
        %452 = vadd.xlane.f32.xlu0 %v451
        %v453 = vpop.xlane.xlu0 %452
        %v454 = vsub.f32 0.0, %v453
        %v455 = vadd.f32 %v441, %v454
        %v456 = vmax.f32 %v455, 0.0
        %v457 = vadd.f32 %v444, %v456
        %s458 = scalar_lea.vmem %s351, 16 [#allocation2]
        %v459 = vld [vmem:[%s458] sm:$0xff]
        %v460 = vadd.f32 %v459, %v426
        %s461 = scalar_lea.vmem %s358, 16 [#allocation3]
        %v462 = vld [vmem:[%s461] sm:$0xff]
        %v463 = vsub.f32 %v460, %v462
        %v464 = vand.u32 2147483647, %v463
        %465 = vadd.xlane.f32.xlu0 %v464
        %v466 = vpop.xlane.xlu0 %465
        %v467 = vsub.f32 0.0, %v466
        %v468 = vadd.f32 %v441, %v467
        %v469 = vmax.f32 %v468, 0.0
        %v470 = vadd.f32 %v457, %v469
        %s471 = scalar_lea.vmem %s351, 24 [#allocation2]
        %v472 = vld [vmem:[%s471] sm:$0xff]
        %v473 = vadd.f32 %v472, %v426
        %s474 = scalar_lea.vmem %s358, 24 [#allocation3]
        %v475 = vld [vmem:[%s474] sm:$0xff]
        %v476 = vsub.f32 %v473, %v475
        %v477 = vand.u32 2147483647, %v476
        %478 = vadd.xlane.f32.xlu0 %v477
        %v479 = vpop.xlane.xlu0 %478
        %v480 = vsub.f32 0.0, %v479
        %v481 = vadd.f32 %v441, %v480
        %v482 = vmax.f32 %v481, 0.0
        %v483 = vadd.f32 %v470, %v482
        %vm484 = vcmask 7168
        %485 = vst.msk [vmem:[%s419] sm:$0xff] %vm484, %v483
        %v486 = vmul.f32 %v424, %v424
        %v487 = vmul.f32 %v425, %v425
        %v488 = vadd.f32 %v486, %v487
        %v489 = vmul.f32 %v426, %v426
        %v490 = vadd.f32 %v488, %v489
        %491 = vadd.xlane.f32.xlu0 %v490
        %v492 = vpop.xlane.xlu0 %491
        %493 = vst.msk [vmem:[%s423] sm:$0xff] %vm484, %v492
        %p494 = scmp.lt.s32.totalorder %s18, 1
        %s495 = scalar_select %p494, %s18, 1
        %s496 = smul.addr %s495, 8
        %s497 = scalar_lea.vmem %s5, %s496
        %p498 = scmp.lt.s32.totalorder %s18, 1
        %s499 = scalar_select %p498, %s18, 1
        %s500 = smul.addr %s499, 8
        %s501 = scalar_lea.vmem %s6, %s500
        // Predicated region
        $region117: #{compute_loss_pallas.1} parent=107 // pred_check
          %p502 = pneg %p166
        $region118: #{compute_loss_pallas.1} parent=107 // pred_check_branch
          %504 = sbr.rel (%p502) target = $region120
        $region119: #{compute_loss_pallas.1} parent=107 // pred_region
          _
        $region120: #{compute_loss_pallas.1} parent=107 // pred_fallthru
          _
        // Predicated region
        $region121: #{compute_loss_pallas.1} parent=107 // pred_check
          %p505 = pneg %p192
        $region122: #{compute_loss_pallas.1} parent=107 // pred_check_branch
          %507 = sbr.rel (%p505) target = $region124
        $region123: #{compute_loss_pallas.1} parent=107 // pred_region
          _
        $region124: #{compute_loss_pallas.1} parent=107 // pred_fallthru
          _
      $region108: #{compute_loss_pallas.1} parent=5 // pred_fallthru
        _
      %p508 = scmp.le.s32.totalorder 2, %s13
      // Predicated region
      $region125: #{compute_loss_pallas.1} parent=5 // pred_check
        %p509 = pneg %p508
      $region126: #{compute_loss_pallas.1} parent=5 // pred_check_branch
        %511 = sbr.rel (%p509) target = $region128
      $region127: #{compute_loss_pallas.1} parent=5 // pred_region
        %s512 = ssub.s32 %s13, 2
        // Predicated region
        $region129: #{compute_loss_pallas.1} parent=127 // pred_check
          %p513 = pneg %p172
        $region130: #{compute_loss_pallas.1} parent=127 // pred_check_branch
          %515 = sbr.rel (%p513) target = $region132
        $region131: #{compute_loss_pallas.1} parent=127 // pred_region
          %p516 = scmp.lt.s32.totalorder %s19, 1
          %s517 = scalar_select %p516, %s19, 1
          %s518 = smul.addr %s517, 8
          %s519 = scalar_lea.vmem %s5, %s518
        $region132: #{compute_loss_pallas.1} parent=127 // pred_fallthru
          _
        // Predicated region
        $region133: #{compute_loss_pallas.1} parent=127 // pred_check
          %p520 = pneg %p198
        $region134: #{compute_loss_pallas.1} parent=127 // pred_check_branch
          %522 = sbr.rel (%p520) target = $region136
        $region135: #{compute_loss_pallas.1} parent=127 // pred_region
          %p523 = scmp.lt.s32.totalorder %s19, 1
          %s524 = scalar_select %p523, %s19, 1
          %s525 = smul.addr %s524, 8
          %s526 = scalar_lea.vmem %s6, %s525
        $region136: #{compute_loss_pallas.1} parent=127 // pred_fallthru
          _
      $region128: #{compute_loss_pallas.1} parent=5 // pred_fallthru
        _
    $region6: #{compute_loss_pallas.1} parent=1 // loop_footer
      %s17 = sadd.s32 1, %s13
    $region7: #{compute_loss_pallas.1} parent=1 // loop_footer_branch
      %12 = sbr.rel target = $region3
    $region8: #{compute_loss_pallas.1} parent=1 // loop_exit
      _

</llo_original>
